<compile_context>
chip_gen: v6e
topology: v6e:2x2x1
jax: 0.10.0
libtpu: 0.0.40
codegen_flags: <defaults>
</compile_context>

<pallas_src>
import functools

import jax
import jax.numpy as jnp
from jax import lax
from jax.experimental import pallas as pl
from jax.experimental.pallas import tpu as pltpu

_LANES = 128
_SUBLANES = 8


def _round_up(x, m):
    return ((x + m - 1) // m) * m


def _cdiv(a, b):
    return (a + b - 1) // b


def _vmem_capacity_bytes():
    try:
        return int(pltpu.get_tpu_info().vmem_capacity_bytes)
    except Exception:
        return 64 * 1024 * 1024  # conservative (v7x-sized) fallback


# ---------------------------------------------------------------------------
# Kernels
# ---------------------------------------------------------------------------

def _single_kernel(x_ref, mo_ref, w_ref, out_ref, *, normalize, n):
    # Whole-array blocks in VMEM; scalar result in SMEM.
    x = x_ref[...].astype(jnp.float32)
    mo = mo_ref[...].astype(jnp.float32)
    w = w_ref[...].astype(jnp.float32)
    y = x - mo
    if normalize:
        nrm = jnp.sqrt(jnp.sum(y * y, axis=1, keepdims=True))
        y = y / (nrm + 1e-12)
    out_ref[0, 0] = jnp.sum(w * y) / jnp.float32(n)


def _norm_tile_kernel(x_ref, mo_ref, w_ref, out_ref, *, hw, t_hw, mask_tail):
    # Blocks (1, C, t_hw); per-batch scalar accumulated into a (1, 8, 128)
    # output block that stays resident across the (arbitrary) spatial axis.
    j = pl.program_id(1)
    x = x_ref[...].astype(jnp.float32)
    mo = mo_ref[...].astype(jnp.float32)
    w = w_ref[...].astype(jnp.float32)
    y = x - mo
    if mask_tail:
        lane = lax.broadcasted_iota(jnp.int32, x.shape, 2)
        valid = lane < (hw - j * t_hw)
        y = jnp.where(valid, y, 0.0)   # mask BEFORE the norm: OOB lanes may be garbage
        w = jnp.where(valid, w, 0.0)
    nrm = jnp.sqrt(jnp.sum(y * y, axis=1, keepdims=True))
    y = y / (nrm + 1e-12)
    s = jnp.sum(w * y)

    @pl.when(j == 0)
    def _():
        out_ref[...] = jnp.zeros_like(out_ref)

    out_ref[...] += s


def _flat_tile_kernel(x_ref, mo_ref, w_ref, out_ref, *, rows, cols, t_r, t_c,
                      mask_rows, mask_cols):
    # normalize=False: no cross-channel coupling, flat (rows, cols) tiles.
    i = pl.program_id(0)
    j = pl.program_id(1)
    x = x_ref[...].astype(jnp.float32)
    mo = mo_ref[...].astype(jnp.float32)
    w = w_ref[...].astype(jnp.float32)
    p = w * (x - mo)
    if mask_rows or mask_cols:
        valid = None
        if mask_rows:
            ridx = lax.broadcasted_iota(jnp.int32, p.shape, 0)
            valid = ridx < (rows - i * t_r)
        if mask_cols:
            cidx = lax.broadcasted_iota(jnp.int32, p.shape, 1)
            vc = cidx < (cols - j * t_c)
            valid = vc if valid is None else jnp.logical_and(valid, vc)
        p = jnp.where(valid, p, 0.0)   # select drops any garbage/NaN from OOB region
    s = jnp.sum(p)

    @pl.when(j == 0)
    def _():
        out_ref[...] = jnp.zeros_like(out_ref)

    out_ref[...] += s


# ---------------------------------------------------------------------------
# Wrapper
# ---------------------------------------------------------------------------

def proj_loss(mid_output, w, mid_original, normalize_new_mid=False,
              *, single_block_max_bytes=None, block_budget_bytes=None):
    """Pallas implementation of ProjLoss.forward. Returns a scalar float32."""
    assert mid_output.shape == w.shape == mid_original.shape
    n, c = mid_output.shape[0], mid_output.shape[1]
    hw = 1
    for d in mid_output.shape[2:]:
        hw *= d

    itemsize = jnp.dtype(mid_output.dtype).itemsize
    total = n * c * hw

    vmem_cap = _vmem_capacity_bytes()
    if single_block_max_bytes is None:        # ~8 MiB on v7x, ~16 MiB on v5e/v6e
        single_block_max_bytes = vmem_cap // 8
    if block_budget_bytes is None:            # per-input block: ~4 MiB v7x, ~8 MiB v5e/v6e
        block_budget_bytes = vmem_cap // 16

    cost = pl.CostEstimate(
        flops=(6 if normalize_new_mid else 3) * total,
        transcendentals=(n * hw) if normalize_new_mid else 0,
        bytes_accessed=3 * total * itemsize + 4,
    )

    # Lane-dense view: flatten all spatial dims onto the minor (lane) axis.
    x = mid_output.reshape(n, c, hw)
    mo = mid_original.reshape(n, c, hw)
    wt = w.reshape(n, c, hw)

    # Estimated VMEM footprint (with (8,128) layout padding) of the no-grid path.
    vmem_single = 3 * n * _round_up(c, _SUBLANES) * _round_up(hw, _LANES) * itemsize

    if vmem_single <= single_block_max_bytes:
        # Small/medium tensors: one invocation, no grid / per-step overhead.
        kernel = functools.partial(_single_kernel,
                                   normalize=normalize_new_mid, n=n)
        vspec = pl.BlockSpec(memory_space=pltpu.MemorySpace.VMEM)
        out = pl.pallas_call(
            kernel,
            out_shape=jax.ShapeDtypeStruct((1, 1), jnp.float32),
            in_specs=[vspec, vspec, vspec],
            out_specs=pl.BlockSpec(memory_space=pltpu.MemorySpace.SMEM),
            compiler_params=pltpu.CompilerParams(
                vmem_limit_bytes=int(min(vmem_cap, vmem_single + (8 << 20)))),
            cost_estimate=cost,
        )(x, mo, wt)
        return out[0, 0]

    if normalize_new_mid:
        # Per-batch blocks spanning full C (needed for the channel L2 norm),
        # tiled over the spatial axis with the largest 128-multiple that fits.
        lanes_budget = max(1, block_budget_bytes // (c * itemsize))
        t_hw = max(_LANES, (lanes_budget // _LANES) * _LANES)
        t_hw = min(t_hw, _round_up(hw, _LANES))
        grid = (n, _cdiv(hw, t_hw))
        mask_tail = (hw % t_hw) != 0
        kernel = functools.partial(_norm_tile_kernel, hw=hw, t_hw=t_hw,
                                   mask_tail=mask_tail)
        in_spec = pl.BlockSpec((1, c, t_hw), lambda i, j: (i, 0, j))
        block_bytes = c * t_hw * itemsize
        n_out = n
        operands = (x, mo, wt)
    else:
        # No cross-channel coupling: flat (N*C, HW) view with tall blocks that
        # read long contiguous HBM chunks.
        rows = n * c
        x2 = x.reshape(rows, hw)
        mo2 = mo.reshape(rows, hw)
        wt2 = wt.reshape(rows, hw)
        t_c = max(_LANES,
                  min(_round_up(hw, _LANES),
                      (block_budget_bytes // (_SUBLANES * itemsize)
                       // _LANES) * _LANES))
        t_r = block_budget_bytes // (t_c * itemsize)
        t_r = max(_SUBLANES, (t_r // _SUBLANES) * _SUBLANES)
        t_r = min(t_r, _round_up(rows, _SUBLANES))
        grid = (_cdiv(rows, t_r), _cdiv(hw, t_c))
        kernel = functools.partial(
            _flat_tile_kernel, rows=rows, cols=hw, t_r=t_r, t_c=t_c,
            mask_rows=(rows % t_r) != 0, mask_cols=(hw % t_c) != 0)
        in_spec = pl.BlockSpec((t_r, t_c), lambda i, j: (i, j))
        block_bytes = t_r * t_c * itemsize
        n_out = grid[0]
        operands = (x2, mo2, wt2)

    # 3 inputs x 2 pipeline buffers + slack for outputs / internal scratch.
    vmem_needed = 6 * block_bytes + (4 << 20)
    partials = pl.pallas_call(
        kernel,
        out_shape=jax.ShapeDtypeStruct((n_out, _SUBLANES, _LANES), jnp.float32),
        grid=grid,
        in_specs=[in_spec, in_spec, in_spec],
        out_specs=pl.BlockSpec((1, _SUBLANES, _LANES), lambda i, j: (i, 0, 0)),
        compiler_params=pltpu.CompilerParams(
            dimension_semantics=("parallel", "arbitrary"),
            vmem_limit_bytes=int(min(vmem_cap, vmem_needed))),
        cost_estimate=cost,
    )(*operands)
    # One accumulated scalar per parallel block; sum once, divide by n once.
    return jnp.sum(partials[:, 0, 0]) / jnp.float32(n)


# ---------------------------------------------------------------------------
# Reference + self-test
# ---------------------------------------------------------------------------

def _proj_loss_ref(mid_output, w, mid_original, normalize_new_mid=False):
    n = mid_output.shape[0]
    y = mid_output.astype(jnp.float32) - mid_original.astype(jnp.float32)
    if normalize_new_mid:
        nrm = jnp.sqrt(jnp.sum(y * y, axis=1, keepdims=True))
        y = y / (nrm + 1e-12)
    return jnp.sum(w.astype(jnp.float32) * y) / n


if __name__ == "__main__":
    key = jax.random.PRNGKey(0)
    ok = True

    # (shape, kwargs): default (single-shot) path and forced gridded paths
    # (tiny budgets exercise tail-lane and tail-row masking).
    cases = [
        ((2, 4, 16, 16), {}),                                    # single-shot
        ((2, 4, 16, 16), dict(single_block_max_bytes=0,
                              block_budget_bytes=2048)),         # gridded, no tails
        ((2, 4, 10, 10), {}),                                    # single, HW % 128 != 0
        ((2, 4, 10, 10), dict(single_block_max_bytes=0,
                              block_budget_bytes=2048)),         # gridded, lane tail mask
        ((3, 5, 9, 9), dict(single_block_max_bytes=0,
                            block_budget_bytes=2048)),           # gridded, row+lane masks
    ]

    for shape, kwargs in cases:
        key, k_x, k_w, k_mo = jax.random.split(key, 4)
        mid_output = jax.random.normal(k_x, shape, dtype=jnp.float32)
        w_param = jax.random.normal(k_w, shape, dtype=jnp.float32)
        mid_original = jax.random.normal(k_mo, shape, dtype=jnp.float32)
        for norm_flag in (False, True):
            got = jax.block_until_ready(
                proj_loss(mid_output, w_param, mid_original,
                          normalize_new_mid=norm_flag, **kwargs))
            want = _proj_loss_ref(mid_output, w_param, mid_original,
                                  normalize_new_mid=norm_flag)
            if not jnp.allclose(got, want, rtol=1e-5, atol=1e-5):
                ok = False

    print("KERNEL_OK" if ok else "KERNEL_MISMATCH")
</pallas_src>

<mosaic_0001>
module attributes {stable_mosaic.version = 11 : i64} {
  func.func @_single_kernel(%arg0: memref<2x4x256xf32, #tpu.memory_space<vmem>>, %arg1: memref<2x4x256xf32, #tpu.memory_space<vmem>>, %arg2: memref<2x4x256xf32, #tpu.memory_space<vmem>>, %arg3: memref<1x1xf32, #tpu.memory_space<smem>>) attributes {dimension_semantics = [], scalar_prefetch = 0 : i64, scratch_operands = 0 : i64, tpu.core_type = #tpu.core_type<tc>} {
    %c0 = arith.constant 0 : index
    %c0_0 = arith.constant 0 : index
    %c0_1 = arith.constant 0 : index
    %0 = vector.load %arg0[%c0, %c0_0, %c0_1] : memref<2x4x256xf32, #tpu.memory_space<vmem>>, vector<2x4x256xf32>
    %c0_2 = arith.constant 0 : index
    %c0_3 = arith.constant 0 : index
    %c0_4 = arith.constant 0 : index
    %1 = vector.load %arg1[%c0_2, %c0_3, %c0_4] : memref<2x4x256xf32, #tpu.memory_space<vmem>>, vector<2x4x256xf32>
    %c0_5 = arith.constant 0 : index
    %c0_6 = arith.constant 0 : index
    %c0_7 = arith.constant 0 : index
    %2 = vector.load %arg2[%c0_5, %c0_6, %c0_7] : memref<2x4x256xf32, #tpu.memory_space<vmem>>, vector<2x4x256xf32>
    %3 = arith.subf %0, %1 : vector<2x4x256xf32>
    %4 = arith.mulf %2, %3 : vector<2x4x256xf32>
    %5 = vector.shape_cast %4 : vector<2x4x256xf32> to vector<1x2x4x256xf32>
    %cst = arith.constant dense<0.000000e+00> : vector<1xf32>
    %6 = vector.multi_reduction <add>, %5, %cst [1, 2, 3] : vector<1x2x4x256xf32> to vector<1xf32>
    %7 = vector.shape_cast %6 : vector<1xf32> to vector<1x1x1x1xf32>
    %8 = vector.extract %7[0, 0, 0, 0] : f32 from vector<1x1x1x1xf32>
    %cst_8 = arith.constant 2.000000e+00 : f32
    %9 = arith.divf %8, %cst_8 : f32
    %c0_9 = arith.constant 0 : index
    %c0_10 = arith.constant 0 : index
    %10 = memref.load %arg3[%c0_9, %c0_10] : memref<1x1xf32, #tpu.memory_space<smem>>
    memref.store %9, %arg3[%c0_9, %c0_10] : memref<1x1xf32, #tpu.memory_space<smem>>
    return
  }
}

</mosaic_0001>

<llo_original>
// kernel: tpu_custom_call.1
$region0: #{tpu_custom_call.1}
  #allocation0 [shape = 'u32[]', space=smem, size = 0x4, offset = 0x4, fixed_abs, tag = 'smem constant byte address 0x4 - core index']
  #allocation1 [shape = 'u32[144,128]{1,0:T(1,128)}', space=vmem, size = 0x12000, scoped, tag = 'internal scratch']
  %s0 = inlined_call_operand.hbm [shape: f32[2,4,256], index: 0, kind: input, shape index: {}]
  %s1 = inlined_call_operand.hbm [shape: f32[2,4,256], index: 1, kind: input, shape index: {}]
  %s2 = inlined_call_operand.hbm [shape: f32[2,4,256], index: 2, kind: input, shape index: {}]
  %s3 = inlined_call_operand.hbm [shape: f32[1,1], index: 3, kind: output, shape index: {}]
  %s4 = sld [smem:[#allocation0]]
  $region34: #{tpu_custom_call.1} parent=0
    _
  %s6 = ssub.s32 1, %s4
  %s7 = scalar_select 0, %s6, %s4
  $region1: #{tpu_custom_call.1} parent=0
    #allocation2 [shape = 'u8[8192]{0}', space=vmem, size = 0x2000, scoped, tag = 'input window, operand 0, single buffered']
    #allocation3 [shape = 's32[1]{0}', space=sflag, size = 0x4, scoped, tag = 'scoped memory for tpu_custom_call.1']
    #allocation4 [shape = 's32[1]{0}', space=sflag, size = 0x4, scoped, tag = 'scoped memory for tpu_custom_call.1']
    #allocation5 [shape = 'u8[8192]{0}', space=vmem, size = 0x2000, scoped, tag = 'input window, operand 1, single buffered']
    #allocation6 [shape = 's32[1]{0}', space=sflag, size = 0x4, scoped, tag = 'scoped memory for tpu_custom_call.1']
    #allocation7 [shape = 'u8[8192]{0}', space=vmem, size = 0x2000, scoped, tag = 'input window, operand 2, single buffered']
    #allocation8 [shape = 'u8[512]{0}', space=smem, size = 0x200, scoped, tag = 'output window, operand 0, single buffered']
    %8 = vsyncpa [#allocation3], 0
    %9 = vsyncpa [#allocation6], 0
    %10 = vsyncpa [#allocation4], 0
    // Predicated region
    $region2: #{tpu_custom_call.1} parent=1 // pred_check
      _
    $region3: #{tpu_custom_call.1} parent=1 // pred_check_branch
      %12 = sbr.rel (0) target = $region5
    $region4: #{tpu_custom_call.1} parent=1 // pred_region
      %s14 = ssub.s32 256, 256
      %15 = vsyncadd [#allocation3], %s14
      %s16 = sshll.u32 [#allocation2], 4
      %s17 = int_to_ptr.vmem [resolvable:$true] %s16
      %22 = dma.hbm_to_vmem [thread:$0]  %s0, 256, %s17, [#allocation3], 128, 128, 8
    $region5: #{tpu_custom_call.1} parent=1 // pred_fallthru
      _
    // Predicated region
    $region6: #{tpu_custom_call.1} parent=1 // pred_check
      _
    $region7: #{tpu_custom_call.1} parent=1 // pred_check_branch
      %24 = sbr.rel (0) target = $region9
    $region8: #{tpu_custom_call.1} parent=1 // pred_region
      %s26 = ssub.s32 256, 256
      %27 = vsyncadd [#allocation6], %s26
      %s28 = sshll.u32 [#allocation5], 4
      %s29 = int_to_ptr.vmem [resolvable:$true] %s28
      %34 = dma.hbm_to_vmem [thread:$0]  %s1, 256, %s29, [#allocation6], 128, 128, 8
    $region9: #{tpu_custom_call.1} parent=1 // pred_fallthru
      _
    // Predicated region
    $region10: #{tpu_custom_call.1} parent=1 // pred_check
      _
    $region11: #{tpu_custom_call.1} parent=1 // pred_check_branch
      %36 = sbr.rel (0) target = $region13
    $region12: #{tpu_custom_call.1} parent=1 // pred_region
      %s38 = ssub.s32 256, 256
      %39 = vsyncadd [#allocation6], %s38
      %s40 = sshll.u32 [#allocation7], 4
      %s41 = int_to_ptr.vmem [resolvable:$true] %s40
      %46 = dma.hbm_to_vmem [thread:$0]  %s2, 256, %s41, [#allocation6], 128, 128, 8
    $region13: #{tpu_custom_call.1} parent=1 // pred_fallthru
      _
    // Predicated region
    $region14: #{tpu_custom_call.1} parent=1 // pred_check
      _
    $region15: #{tpu_custom_call.1} parent=1 // pred_check_branch
      %48 = sbr.rel (0) target = $region17
    $region16: #{tpu_custom_call.1} parent=1 // pred_region
      %49 = dma.done [#allocation3], 256
    $region17: #{tpu_custom_call.1} parent=1 // pred_fallthru
      _
    // Predicated region
    $region18: #{tpu_custom_call.1} parent=1 // pred_check
      _
    $region19: #{tpu_custom_call.1} parent=1 // pred_check_branch
      %51 = sbr.rel (0) target = $region21
    $region20: #{tpu_custom_call.1} parent=1 // pred_region
      %52 = dma.done [#allocation6], 256
    $region21: #{tpu_custom_call.1} parent=1 // pred_fallthru
      _
    // Predicated region
    $region22: #{tpu_custom_call.1} parent=1 // pred_check
      _
    $region23: #{tpu_custom_call.1} parent=1 // pred_check_branch
      %54 = sbr.rel (0) target = $region25
    $region24: #{tpu_custom_call.1} parent=1 // pred_region
      %55 = dma.done [#allocation6], 256
    $region25: #{tpu_custom_call.1} parent=1 // pred_fallthru
      _
    %v56 = vld [vmem:[#allocation2] sm:$0xff]
    %v57 = vld [vmem:[#allocation2 + $0x8] sm:$0xff]
    %v58 = vld [vmem:[#allocation5] sm:$0xff]
    %v59 = vld [vmem:[#allocation5 + $0x8] sm:$0xff]
    %v60 = vld [vmem:[#allocation7] sm:$0xff]
    %v61 = vld [vmem:[#allocation7 + $0x8] sm:$0xff]
    %v62 = vsub.f32 %v56, %v58
    %v63 = vsub.f32 %v57, %v59
    %v64 = vmul.f32 %v60, %v62
    %v65 = vmul.f32 %v61, %v63
    %v68 = vcombine.high %v64, %v64
    %v69 = vcombine.high %v65, %v65
    %vm72 = vcmask 1043456
    %v73 = vsel %vm72, %v64, 0.0
    %v74 = vsel %vm72, %v68, 0.0
    %v75 = vadd.f32 %v73, %v74
    %v76 = vsel %vm72, %v65, 0.0
    %v77 = vadd.f32 %v75, %v76
    %v78 = vsel %vm72, %v69, 0.0
    %v79 = vadd.f32 %v77, %v78
    %80 = vadd.xlane.f32.xlu0 %v79
    %v81 = vpop.xlane.xlu0 %80
    %v82 = vrot.slane %v81, 4
    %v83 = vadd.f32 %v81, %v82
    %v84 = vrot.slane %v83, 2
    %v85 = vadd.f32 %v83, %v84
    %v86 = vrot.slane %v85, 1
    %v87 = vadd.f32 %v85, %v86
    %s88 = vtos %v87
    %v89 = vrcp.pop 2.0
    %s90 = vtos %v89
    %s91 = smul.f32 %s88, %s90
    %s92 = scalar_lea.smem [#allocation8], 0
    %93 = sst [smem:[%s92]] %s91
    // Predicated region
    $region26: #{tpu_custom_call.1} parent=1 // pred_check
      _
    $region27: #{tpu_custom_call.1} parent=1 // pred_check_branch
      %95 = sbr.rel (0) target = $region29
    $region28: #{tpu_custom_call.1} parent=1 // pred_region
      %s97 = ssub.s32 16, 16
      %98 = vsyncadd [#allocation4], %s97
      %101 = dma.smem_to_hbm [#allocation8], 16, %s3, [#allocation4]
    $region29: #{tpu_custom_call.1} parent=1 // pred_fallthru
      _
    // Predicated region
    $region30: #{tpu_custom_call.1} parent=1 // pred_check
      _
    $region31: #{tpu_custom_call.1} parent=1 // pred_check_branch
      %103 = sbr.rel (0) target = $region33
    $region32: #{tpu_custom_call.1} parent=1 // pred_region
      %104 = dma.done [#allocation4], 16
    $region33: #{tpu_custom_call.1} parent=1 // pred_fallthru
      _
    %105 = sfence
    %106 = vsyncpa [#allocation3], 1
    %107 = vsyncpa [#allocation6], 1
    %108 = vsyncpa [#allocation4], 1

</llo_original>
